<compile_context>
chip_gen: v7x
topology: tpu7x:2x2x1
jax: 0.10.0
libtpu: 0.0.40
codegen_flags: <defaults>
</compile_context>

<pallas_src>
import jax
import jax.numpy as jnp
from jax.experimental import pallas as pl
from jax.experimental.pallas import tpu as pltpu


# ---------------------------------------------------------------------------
# Fused kernel: global-avg-pool -> 1x1 conv (fc) -> sigmoid -> gate
# ---------------------------------------------------------------------------
def _ese_kernel(x_ref, wt_ref, b_ref, o_ref):
    # x_ref : (TN, C, HW)  TN images, channels on sublanes, HW on lanes
    # wt_ref: (C, C)       fc weight TRANSPOSED to (in_channel, out_channel)
    # b_ref : (1, C)       fc bias
    # o_ref : (TN, C, HW)
    x = x_ref[...]                                            # native dtype

    # Global average pool over the spatial (lane) axis, f32 accumulation.
    mean = jnp.mean(x, axis=2, dtype=jnp.float32)             # (TN, C)

    # Batched 1x1 conv on the pooled vectors: y = mean @ W^T + b.
    y = jnp.dot(mean, wt_ref[...],
                preferred_element_type=jnp.float32) + b_ref[...]   # (TN, C)

    # Exact sigmoid (matches nn.Sigmoid); exp runs on the EUP slot.  The tiny
    # (TN, C) divide is negligible, and exactness keeps verification tight.
    gate = 1.0 / (1.0 + jnp.exp(-y))                          # (TN, C) f32

    # Per-channel gate applied to the full feature map.  Cast the gate (not
    # the feature map) so the big elementwise pass stays in x's dtype.
    o_ref[...] = (x * gate[:, :, None].astype(x.dtype)).astype(o_ref.dtype)


# ---------------------------------------------------------------------------
# Tiling heuristic
# ---------------------------------------------------------------------------
def _pick_tn(n, c, hw, itemsize, target_bytes=4 << 20):
    """Images per grid step: biggest block <= target, preferring >= 4 (then 2)
    grid steps so both v7x TensorCores get work and DMA pipelines."""
    per_img = c * hw * itemsize
    divisors = [d for d in range(1, n + 1) if n % d == 0]
    fitting = [d for d in divisors if d * per_img <= target_bytes]
    if not fitting:
        # Even a single image exceeds the target block size.
        # TODO(synk): two-phase (pool-then-gate) spatial tiling for feature
        # maps whose single-image slab does not fit comfortably in VMEM.
        return 1
    for min_steps in (4, 2, 1):
        cands = [d for d in fitting if n // d >= min_steps]
        if cands:
            return max(cands)
    return 1


# ---------------------------------------------------------------------------
# Wrapper
# ---------------------------------------------------------------------------
def ese_layer(x_nchw, fc_weight, fc_bias):
    """ESELayer forward.

    x_nchw:    (N, C, H, W)
    fc_weight: (C, C)  — nn.Conv2d(C, C, 1).weight squeezed to (out, in)
    fc_bias:   (C,)
    """
    N, C, H, W = x_nchw.shape
    HW = H * W
    itemsize = jnp.dtype(x_nchw.dtype).itemsize

    x3 = x_nchw.reshape(N, C, HW)   # lane-dense view, no data movement
    wt = fc_weight.T                # (in, out) so the kernel does mean @ wt
    b2 = fc_bias.reshape(1, C)

    TN = _pick_tn(N, C, HW, itemsize)
    block_bytes = TN * C * HW * itemsize
    # in + out, double-buffered, plus headroom for the (tiny) weights.
    vmem_limit = int(min(100 << 20, max(32 << 20, 6 * block_bytes)))

    out = pl.pallas_call(
        _ese_kernel,
        out_shape=jax.ShapeDtypeStruct((N, C, HW), x_nchw.dtype),
        grid_spec=pltpu.PrefetchScalarGridSpec(
            num_scalar_prefetch=0,
            grid=(N // TN,),
            in_specs=[
                pl.BlockSpec((TN, C, HW), lambda n: (n, 0, 0)),
                pl.BlockSpec((C, C), lambda n: (0, 0)),   # DMA'd once, reused
                pl.BlockSpec((1, C), lambda n: (0, 0)),
            ],
            out_specs=pl.BlockSpec((TN, C, HW), lambda n: (n, 0, 0)),
        ),
        compiler_params=pltpu.CompilerParams(
            dimension_semantics=("parallel",),
            vmem_limit_bytes=vmem_limit),
    )(x3, wt, b2)
    return out.reshape(N, C, H, W)


# ---------------------------------------------------------------------------
# Pure-JAX reference for verification
# ---------------------------------------------------------------------------
def ese_layer_ref(x, fc_weight, fc_bias):
    se = x.mean(axis=(2, 3), keepdims=True)                        # (N, C, 1, 1)
    y = jnp.einsum("oc,ncij->noij", fc_weight, se) \
        + fc_bias.reshape(1, -1, 1, 1)
    gate = 1.0 / (1.0 + jnp.exp(-y))
    return x * gate


if __name__ == "__main__":
    # Small shapes consistent with ESELayer(channels=4) on a 2x4x16x16 input.
    N, C, H, W = 2, 4, 16, 16

    key = jax.random.PRNGKey(0)
    kx, kw, kb = jax.random.split(key, 3)

    x = jax.random.normal(kx, (N, C, H, W), dtype=jnp.float32)
    # nn.Conv2d(C, C, 1) weight (C, C, 1, 1) stored as (C, C); bias (C,)
    fc_weight = jax.random.normal(kw, (C, C), dtype=jnp.float32) * 0.1
    fc_bias = jax.random.normal(kb, (C,), dtype=jnp.float32) * 0.1

    out = jax.block_until_ready(ese_layer(x, fc_weight, fc_bias))
    ref = ese_layer_ref(x, fc_weight, fc_bias)

    assert out.shape == (N, C, H, W)
    assert jnp.allclose(out, ref, atol=1e-5, rtol=1e-5)

    print("KERNEL_OK")
</pallas_src>

<mosaic_0001>
module attributes {stable_mosaic.version = 11 : i64} {
  func.func @_ese_kernel(%arg0: i32, %arg1: memref<1x4x256xf32, #tpu.memory_space<vmem>>, %arg2: memref<4x4xf32, #tpu.memory_space<vmem>>, %arg3: memref<1x4xf32, #tpu.memory_space<vmem>>, %arg4: memref<1x4x256xf32, #tpu.memory_space<vmem>>) attributes {dimension_semantics = [#tpu.dimension_semantics<parallel>], iteration_bounds = array<i64: 2>, scalar_prefetch = 0 : i64, scratch_operands = 0 : i64, tpu.core_type = #tpu.core_type<tc>, window_params = [{transform_indices = @transform_0, window_bounds = array<i64: 1, 4, 256>}, {pipeline_mode = #tpu.pipeline_mode<synchronous>, transform_indices = @transform_1, window_bounds = array<i64: 4, 4>}, {pipeline_mode = #tpu.pipeline_mode<synchronous>, transform_indices = @transform_2, window_bounds = array<i64: 1, 4>}, {transform_indices = @transform_3, window_bounds = array<i64: 1, 4, 256>}]} {
    %c0 = arith.constant 0 : index
    %c0_0 = arith.constant 0 : index
    %c0_1 = arith.constant 0 : index
    %0 = vector.load %arg1[%c0, %c0_0, %c0_1] : memref<1x4x256xf32, #tpu.memory_space<vmem>>, vector<1x4x256xf32>
    %cst = arith.constant dense<0.000000e+00> : vector<1x4xf32>
    %1 = vector.multi_reduction <add>, %0, %cst [2] : vector<1x4x256xf32> to vector<1x4xf32>
    %cst_2 = arith.constant 2.560000e+02 : f32
    %2 = vector.broadcast %cst_2 : f32 to vector<1x4xf32>
    %3 = arith.divf %1, %2 : vector<1x4xf32>
    %c0_3 = arith.constant 0 : index
    %c0_4 = arith.constant 0 : index
    %4 = vector.load %arg2[%c0_3, %c0_4] : memref<4x4xf32, #tpu.memory_space<vmem>>, vector<4x4xf32>
    %cst_5 = arith.constant dense<0.000000e+00> : vector<1x4xf32>
    %5 = tpu.matmul %3, %4, %cst_5 {dimension_numbers = #tpu.dot_dimension_numbers<[1], [0], [0], [1], [0, 0, 1, 1], [], []>} : vector<1x4xf32>, vector<4x4xf32>, vector<1x4xf32> -> vector<1x4xf32>
    %c0_6 = arith.constant 0 : index
    %c0_7 = arith.constant 0 : index
    %6 = vector.load %arg3[%c0_6, %c0_7] : memref<1x4xf32, #tpu.memory_space<vmem>>, vector<1x4xf32>
    %7 = arith.addf %5, %6 : vector<1x4xf32>
    %cst_8 = arith.constant 0.000000e+00 : f32
    %8 = vector.broadcast %cst_8 : f32 to vector<1x4xf32>
    %9 = arith.subf %8, %7 : vector<1x4xf32>
    %10 = math.exp %9 : vector<1x4xf32>
    %cst_9 = arith.constant 1.000000e+00 : f32
    %11 = vector.broadcast %cst_9 : f32 to vector<1x4xf32>
    %12 = arith.addf %11, %10 : vector<1x4xf32>
    %cst_10 = arith.constant 1.000000e+00 : f32
    %13 = vector.broadcast %cst_10 : f32 to vector<1x4xf32>
    %14 = arith.divf %13, %12 : vector<1x4xf32>
    %15 = vector.shape_cast %14 : vector<1x4xf32> to vector<1x4x1xf32>
    %16 = vector.broadcast %15 : vector<1x4x1xf32> to vector<1x4x256xf32>
    %17 = arith.mulf %0, %16 : vector<1x4x256xf32>
    %c0_11 = arith.constant 0 : index
    %c0_12 = arith.constant 0 : index
    %c0_13 = arith.constant 0 : index
    %18 = vector.load %arg4[%c0_11, %c0_12, %c0_13] : memref<1x4x256xf32, #tpu.memory_space<vmem>>, vector<1x4x256xf32>
    tpu.vector_store %arg4[%c0_11, %c0_12, %c0_13], %17 {strides = array<i32>} : memref<1x4x256xf32, #tpu.memory_space<vmem>>, vector<1x4x256xf32>,
    return
  }
  func.func @transform_0(%arg0: i32) -> (i32, i32, i32) {
    %c0_i32 = arith.constant 0 : i32
    %c0_i32_0 = arith.constant 0 : i32
    %c0_i32_1 = arith.constant 0 : i32
    return %arg0, %c0_i32, %c0_i32_0 : i32, i32, i32
  }
  func.func @transform_1(%arg0: i32) -> (i32, i32) {
    %c0_i32 = arith.constant 0 : i32
    %c0_i32_0 = arith.constant 0 : i32
    %c0_i32_1 = arith.constant 0 : i32
    return %c0_i32, %c0_i32_0 : i32, i32
  }
  func.func @transform_2(%arg0: i32) -> (i32, i32) {
    %c0_i32 = arith.constant 0 : i32
    %c0_i32_0 = arith.constant 0 : i32
    %c0_i32_1 = arith.constant 0 : i32
    return %c0_i32, %c0_i32_0 : i32, i32
  }
  func.func @transform_3(%arg0: i32) -> (i32, i32, i32) {
    %c0_i32 = arith.constant 0 : i32
    %c0_i32_0 = arith.constant 0 : i32
    %c0_i32_1 = arith.constant 0 : i32
    return %arg0, %c0_i32, %c0_i32_0 : i32, i32, i32
  }
}

</mosaic_0001>

<llo_original>
// kernel: tpu_custom_call.1
$region0: #{tpu_custom_call.1}
  #allocation0 [shape = 'u32[]', space=smem, size = 0x4, offset = 0x4, fixed_abs, tag = 'smem constant byte address 0x4 - core index']
  #allocation1 [shape = 'u32[144,128]{1,0:T(1,128)}', space=vmem, size = 0x12000, scoped, tag = 'internal scratch']
  %s0 = inlined_call_operand.hbm [shape: f32[2,4,256], index: 0, kind: input, shape index: {}]
  %s1 = inlined_call_operand.hbm [shape: f32[4,4], index: 1, kind: input, shape index: {}]
  %s2 = inlined_call_operand.vmem [shape: f32[1,4], index: 2, kind: input, shape index: {}]
  %s3 = inlined_call_operand.hbm [shape: f32[2,4,256], index: 3, kind: output, shape index: {}]
  %s4 = sld [smem:[#allocation0]]
  $region53: #{tpu_custom_call.1} parent=0
    _
  %s6 = ssub.s32 1, %s4
  %s7 = scalar_select 0, %s6, %s4
  $region1: #{tpu_custom_call.1} parent=0
    #allocation2 [shape = 'u8[8192]{0}', space=vmem, size = 0x2000, scoped, tag = 'input window, operand 0']
    #allocation3 [shape = 's32[2]{0}', space=sflag, size = 0x8, scoped, tag = 'scoped memory for tpu_custom_call.1']
    #allocation4 [shape = 's32[2]{0}', space=sflag, size = 0x8, scoped, tag = 'scoped memory for tpu_custom_call.1']
    #allocation5 [shape = 'u8[2048]{0}', space=vmem, size = 0x800, scoped, tag = 'input window, operand 1, single buffered']
    #allocation6 [shape = 's32[1]{0}', space=sflag, size = 0x4, scoped, tag = 'scoped memory for tpu_custom_call.1']
    #allocation7 [shape = 'u8[8192]{0}', space=vmem, size = 0x2000, scoped, tag = 'output window, operand 0']
    %8 = vsyncpa [#allocation3], 0
    %s9 = scalar_lea.sflag [#allocation3], 1
    %10 = vsyncpa %s9, 0
    %11 = vsyncpa [#allocation6], 0
    %12 = vsyncpa [#allocation4], 0
    %s13 = scalar_lea.sflag [#allocation4], 1
    %14 = vsyncpa %s13, 0
    loop: start=0, step=1, limit=4
    $region2: #{tpu_custom_call.1} parent=1 // loop_pre_header
      _
    $region3: #{tpu_custom_call.1} parent=1 // loop_header
      %s16 = sphi 0, %s20
      %p17 = scmp.ge.s32.totalorder %s16, 4
      %s26 = sphi 0, %s28
      %s29 = sphi 0, %s26
      %s30 = sphi 0, %s29
      %s46 = sphi 0, %s30
      %s50 = sphi 0, %s50
      %s52 = sphi 0, %s50
      %s53 = sphi 0, %s52
      %s67 = sphi 0, %s53
      %s71 = sphi 0, %s71
      %s73 = sphi 0, %s71
      %s74 = sphi 0, %s73
      %s88 = sphi 0, %s74
      %s94 = sphi 0, %s96
      %s97 = sphi 0, %s94
      %s98 = sphi 0, %s97
      %s114 = sphi 0, %s98
    $region4: #{tpu_custom_call.1} parent=1 // loop_header_branch
      %19 = sbr.rel (%p17) target = $region8
    $region5: #{tpu_custom_call.1} parent=1 // loop_body
      %s21 = ssub.s32 %s16, 1
      %s22 = ssub.s32 %s16, 2
      %s23 = sadd.s32 %s16, 1
      %s24 = ssub.s32 %s16, %s23
      %p25 = scmp.eq.s32.totalorder %s24, 0
      %s27 = sadd.s32 %s26, 1
      %s28 = scalar_select %p25, %s26, %s27
      %p31 = pneg %p25
      %p32 = scmp.eq.s32.totalorder %s16, 1
      %p33 = por %p31, %p32
      %p34 = scmp.ne.s32.totalorder %s26, %s29
      %p35 = scmp.eq.s32.totalorder %s16, 0
      %p36 = por %p34, %p35
      %p37 = scmp.ne.s32.totalorder %s26, %s29
      %p38 = scmp.eq.s32.totalorder %s21, 1
      %p39 = por %p37, %p38
      %p40 = scmp.ne.s32.totalorder %s29, %s30
      %p41 = scmp.eq.s32.totalorder %s21, 0
      %p42 = por %p40, %p41
      %p43 = scmp.ne.s32.totalorder %s29, %s30
      %p44 = scmp.eq.s32.totalorder %s22, 1
      %p45 = por %p43, %p44
      %p47 = scmp.ne.s32.totalorder %s30, %s46
      %p48 = scmp.eq.s32.totalorder %s22, 0
      %p49 = por %p47, %p48
      %s51 = sadd.s32 %s50, 1
      %p54 = scmp.eq.s32.totalorder %s16, 1
      %p55 = scmp.ne.s32.totalorder %s50, %s52
      %p56 = scmp.eq.s32.totalorder %s16, 0
      %p57 = por %p55, %p56
      %p58 = scmp.ne.s32.totalorder %s50, %s52
      %p59 = scmp.eq.s32.totalorder %s21, 1
      %p60 = por %p58, %p59
      %p61 = scmp.ne.s32.totalorder %s52, %s53
      %p62 = scmp.eq.s32.totalorder %s21, 0
      %p63 = por %p61, %p62
      %p64 = scmp.ne.s32.totalorder %s52, %s53
      %p65 = scmp.eq.s32.totalorder %s22, 1
      %p66 = por %p64, %p65
      %p68 = scmp.ne.s32.totalorder %s53, %s67
      %p69 = scmp.eq.s32.totalorder %s22, 0
      %p70 = por %p68, %p69
      %s72 = sadd.s32 %s71, 1
      %p75 = scmp.eq.s32.totalorder %s16, 1
      %p76 = scmp.ne.s32.totalorder %s71, %s73
      %p77 = scmp.eq.s32.totalorder %s16, 0
      %p78 = por %p76, %p77
      %p79 = scmp.ne.s32.totalorder %s71, %s73
      %p80 = scmp.eq.s32.totalorder %s21, 1
      %p81 = por %p79, %p80
      %p82 = scmp.ne.s32.totalorder %s73, %s74
      %p83 = scmp.eq.s32.totalorder %s21, 0
      %p84 = por %p82, %p83
      %p85 = scmp.ne.s32.totalorder %s73, %s74
      %p86 = scmp.eq.s32.totalorder %s22, 1
      %p87 = por %p85, %p86
      %p89 = scmp.ne.s32.totalorder %s74, %s88
      %p90 = scmp.eq.s32.totalorder %s22, 0
      %p91 = por %p89, %p90
      %s92 = ssub.s32 %s16, %s23
      %p93 = scmp.eq.s32.totalorder %s92, 0
      %s95 = sadd.s32 %s94, 1
      %s96 = scalar_select %p93, %s94, %s95
      %p99 = pneg %p93
      %p100 = scmp.eq.s32.totalorder %s16, 1
      %p101 = por %p99, %p100
      %p102 = scmp.ne.s32.totalorder %s94, %s97
      %p103 = scmp.eq.s32.totalorder %s16, 0
      %p104 = por %p102, %p103
      %p105 = scmp.ne.s32.totalorder %s94, %s97
      %p106 = scmp.eq.s32.totalorder %s21, 1
      %p107 = por %p105, %p106
      %p108 = scmp.ne.s32.totalorder %s97, %s98
      %p109 = scmp.eq.s32.totalorder %s21, 0
      %p110 = por %p108, %p109
      %p111 = scmp.ne.s32.totalorder %s97, %s98
      %p112 = scmp.eq.s32.totalorder %s22, 1
      %p113 = por %p111, %p112
      %p115 = scmp.ne.s32.totalorder %s98, %s114
      %p116 = scmp.eq.s32.totalorder %s22, 0
      %p117 = por %p115, %p116
      %p118 = scmp.le.s32.totalorder 1, %s16
      %p119 = scmp.lt.s32.totalorder %s16, 3
      %p120 = pnand %p118, %p119
      %p121 = pneg %p120
      // Predicated region
      $region9: #{tpu_custom_call.1} parent=5 // pred_check
        _
      $region10: #{tpu_custom_call.1} parent=5 // pred_check_branch
        %123 = sbr.rel (%p120) target = $region12
      $region11: #{tpu_custom_call.1} parent=5 // pred_region
        %s124 = ssub.s32 %s16, 1
        // Predicated region
        $region13: #{tpu_custom_call.1} parent=11 // pred_check
          %p125 = pneg %p63
        $region14: #{tpu_custom_call.1} parent=11 // pred_check_branch
          %127 = sbr.rel (%p125) target = $region16
        $region15: #{tpu_custom_call.1} parent=11 // pred_region
          %s129 = ssub.s32 64, 64
          %130 = vsyncadd [#allocation6], %s129
          %s132 = sshll.u32 [#allocation5], 4
          %s133 = int_to_ptr.vmem [resolvable:$true] %s132
          %135 = dma.hbm_to_vmem [thread:$0]  %s1, 64, %s133, [#allocation6]
        $region16: #{tpu_custom_call.1} parent=11 // pred_fallthru
          _
        // Predicated region
        $region17: #{tpu_custom_call.1} parent=11 // pred_check
          %p136 = pneg %p84
        $region18: #{tpu_custom_call.1} parent=11 // pred_check_branch
          %138 = sbr.rel (%p136) target = $region20
        $region19: #{tpu_custom_call.1} parent=11 // pred_region
          _
        $region20: #{tpu_custom_call.1} parent=11 // pred_fallthru
          _
      $region12: #{tpu_custom_call.1} parent=5 // pred_fallthru
        _
      %p139 = scmp.lt.s32.totalorder %s16, 2
      // Predicated region
      $region21: #{tpu_custom_call.1} parent=5 // pred_check
        %p140 = pneg %p139
      $region22: #{tpu_custom_call.1} parent=5 // pred_check_branch
        %142 = sbr.rel (%p140) target = $region24
      $region23: #{tpu_custom_call.1} parent=5 // pred_region
        // Predicated region
        $region25: #{tpu_custom_call.1} parent=23 // pred_check
          %p143 = pneg %p36
        $region26: #{tpu_custom_call.1} parent=23 // pred_check_branch
          %145 = sbr.rel (%p143) target = $region28
        $region27: #{tpu_custom_call.1} parent=23 // pred_region
          %s146 = sand.u32 %s26, 1
          %s147 = scalar_lea.sflag [#allocation3], %s146
          %s148 = sand.u32 %s26, 1
          %s149 = smul.addr %s148, 8
          %s150 = scalar_lea.vmem [#allocation2], %s149
          %s152 = ssub.s32 128, 128
          %153 = vsyncadd %s147, %s152
          %s154 = smul.addr %s16, 2
          %s155 = smul.addr %s154, 64
          %s156 = scalar_lea.hbm %s0, %s155
          %s158 = sshll.u32 %s150, 4
          %s159 = int_to_ptr.vmem [resolvable:$true] %s158
          %161 = dma.hbm_to_vmem [thread:$0]  %s156, 128, %s159, %s147
        $region28: #{tpu_custom_call.1} parent=23 // pred_fallthru
          _
      $region24: #{tpu_custom_call.1} parent=5 // pred_fallthru
        _
      %p162 = scmp.le.s32.totalorder 1, %s16
      %p163 = scmp.lt.s32.totalorder %s16, 3
      %p164 = pnand %p162, %p163
      %p165 = pneg %p164
      // Predicated region
      $region29: #{tpu_custom_call.1} parent=5 // pred_check
        _
      $region30: #{tpu_custom_call.1} parent=5 // pred_check_branch
        %167 = sbr.rel (%p164) target = $region32
      $region31: #{tpu_custom_call.1} parent=5 // pred_region
        %s168 = ssub.s32 %s16, 1
        %s169 = sand.u32 %s29, 1
        %s170 = scalar_lea.sflag [#allocation3], %s169
        %s171 = sand.u32 %s29, 1
        %s172 = smul.addr %s171, 8
        %s173 = scalar_lea.vmem [#allocation2], %s172
        // Predicated region
        $region33: #{tpu_custom_call.1} parent=31 // pred_check
          %p174 = pneg %p42
        $region34: #{tpu_custom_call.1} parent=31 // pred_check_branch
          %176 = sbr.rel (%p174) target = $region36
        $region35: #{tpu_custom_call.1} parent=31 // pred_region
          %177 = dma.done %s170, 128
        $region36: #{tpu_custom_call.1} parent=31 // pred_fallthru
          _
        // Predicated region
        $region37: #{tpu_custom_call.1} parent=31 // pred_check
          %p178 = pneg %p63
        $region38: #{tpu_custom_call.1} parent=31 // pred_check_branch
          %180 = sbr.rel (%p178) target = $region40
        $region39: #{tpu_custom_call.1} parent=31 // pred_region
          %181 = dma.done [#allocation6], 64
        $region40: #{tpu_custom_call.1} parent=31 // pred_fallthru
          _
        %s182 = sand.u32 %s29, 1
        %s183 = scalar_lea.sflag [#allocation3], %s182
        %s184 = sand.u32 %s29, 1
        %s185 = smul.addr %s184, 8
        %s186 = scalar_lea.vmem [#allocation2], %s185
        %p187 = pneg %p42
        %p188 = pneg %p39
        %p189 = pneg %p63
        %p190 = pneg %p60
        %p191 = pneg %p84
        %p192 = pneg %p81
        %p193 = pneg %p110
        %p194 = pneg %p107
        %s195 = sand.u32 %s97, 1
        %s196 = scalar_lea.sflag [#allocation4], %s195
        %s197 = sand.u32 %s97, 1
        %s198 = smul.addr %s197, 8
        %s199 = scalar_lea.vmem [#allocation7], %s198
        %v200 = vld [vmem:[%s173] sm:$0xff]
        %v202 = vcombine.high %v200, %v200
        %vm204 = vcmask 1043456
        %v205 = vsel %vm204, %v200, 0.0
        %v206 = vsel %vm204, %v202, 0.0
        %v207 = vadd.f32 %v205, %v206
        %208 = vadd.xlane.f32.xlu0 %v207
        %v209 = vpop.xlane.xlu0 %208
        %v210 = vrcp.pop 256.0
        %v211 = vmul.f32 %v209, %v210
        %v212 = vld [vmem:[#allocation5] sm:$0xf]
        %v213 = vld [vmem:[%s2] sm:$0x1]
        %v215 = vlaneseq
        %v216 = vand.u32 %v215, 127
        %v217 = vlaneseq
        %v218 = vshrl.u32 %v217, 7
        %v219 = vsub.s32 %v216, %v218
        %v220 = vrot.slane %v211, %v219
        %vm221 = vcmask 31744
        %v222 = vsel %vm221, %v220, 0
        %v225 = vsel %vm204, %v212, 0
        %227 = vmatprep.subr.mxu0 0.0
        %228 = vmatpush1.msra.mxu0 %v225
        %229 = vmatprep.subr.mxu0 0.0
        %230 = vmatpush1.msra.mxu0 0.0
        %231 = vmatprep.subr.mxu0 0.0
        %232 = vmatpush1.msra.mxu0 0.0
        %233 = vmatprep.subr.mxu0 0.0
        %234 = vmatpush1.msra.mxu0 0.0
        %235 = vmatprep.subr.mxu0 0.0
        %236 = vmatpush1.msra.mxu0 0.0
        %237 = vmatprep.subr.mxu0 0.0
        %238 = vmatpush1.msra.mxu0 0.0
        %239 = vmatprep.subr.mxu0 0.0
        %240 = vmatpush1.msra.mxu0 0.0
        %241 = vmatprep.subr.mxu0 0.0
        %242 = vmatpush1.msra.mxu0 0.0
        %243 = vmatprep.subr.mxu0 0.0
        %244 = vmatpush1.msra.mxu0 0.0
        %245 = vmatprep.subr.mxu0 0.0
        %246 = vmatpush1.msra.mxu0 0.0
        %247 = vmatprep.subr.mxu0 0.0
        %248 = vmatpush1.msra.mxu0 0.0
        %249 = vmatprep.subr.mxu0 0.0
        %250 = vmatpush1.msra.mxu0 0.0
        %251 = vmatprep.subr.mxu0 0.0
        %252 = vmatpush1.msra.mxu0 0.0
        %253 = vmatprep.subr.mxu0 0.0
        %254 = vmatpush1.msra.mxu0 0.0
        %255 = vmatprep.subr.mxu0 0.0
        %256 = vmatpush1.msra.mxu0 0.0
        %257 = vmatprep.subr.mxu0 0.0
        %258 = vmatpush1.msra.mxu0 0.0
        %259 = vmatprep.subr.mxu0 0.0
        %260 = vmatpush1.msra.mxu0 0.0
        %261 = vmatprep.subr.mxu0 0.0
        %262 = vmatpush1.msra.mxu0 0.0
        %263 = vmatprep.subr.mxu0 0.0
        %264 = vmatpush1.msra.mxu0 0.0
        %265 = vmatprep.subr.mxu0 0.0
        %266 = vmatpush1.msra.mxu0 0.0
        %267 = vmatprep.subr.mxu0 0.0
        %268 = vmatpush1.msra.mxu0 0.0
        %269 = vmatprep.subr.mxu0 0.0
        %270 = vmatpush1.msra.mxu0 0.0
        %271 = vmatprep.subr.mxu0 0.0
        %272 = vmatpush1.msra.mxu0 0.0
        %273 = vmatprep.subr.mxu0 0.0
        %274 = vmatpush1.msra.mxu0 0.0
        %275 = vmatprep.subr.mxu0 0.0
        %276 = vmatpush1.msra.mxu0 0.0
        %277 = vmatprep.subr.mxu0 0.0
        %278 = vmatpush1.msra.mxu0 0.0
        %279 = vmatprep.subr.mxu0 0.0
        %280 = vmatpush1.msra.mxu0 0.0
        %281 = vmatprep.subr.mxu0 0.0
        %282 = vmatpush1.msra.mxu0 0.0
        %283 = vmatprep.subr.mxu0 0.0
        %284 = vmatpush1.msra.mxu0 0.0
        %285 = vmatprep.subr.mxu0 0.0
        %286 = vmatpush1.msra.mxu0 0.0
        %287 = vmatprep.subr.mxu0 0.0
        %288 = vmatpush1.msra.mxu0 0.0
        %289 = vmatprep.subr.mxu0 0.0
        %290 = vmatpush1.msra.mxu0 0.0
        %291 = vmatprep.mubr.f32.mxu0 0.0
        %292 = vmatmul.mubr.f32.gmra.mrb[0].mxu0 %v222
        %v293 = vpop.f32.mrb[0].mxu0
        %v294 = vadd.f32 %v213, %v293
        %v295 = vpop.f32.mrb[0].mxu0
        %296 = vdwg.mxu0
        %v297 = vsub.f32 0.0, %v294
        %v298 = vmul.f32 %v297, 1.442695
        %v299 = vpow.pop %v298
        %v300 = vadd.f32 %v299, 1.0
        %v301 = vrcp.pop %v300
        %v302 = vmul.f32 1.0, %v301
        %v303 = vlaneseq
        %v304 = vshrl.u32 %v303, 7
        %v305 = vsub.s32 0, %v304
        %v306 = vrot.slane %v302, %v305
        %308 = vbcast.lane.b32.xlu0 %v306, 256
        %v309 = vpop.permute.xlu0 %308
        %v312 = vunpack.c.l.s4 839922192
        %v313 = vunpack.c.0.s8 %v312
        %v314 = vlaneseq
        %v315 = vshrl.u32 %v314, 7
        %v316 = vsub.s32 %v313, %v315
        %v317 = vrot.slane %v309, %v316
        %v319 = vmul.f32 %v200, %v317
        %320 = vst [vmem:[%s199] sm:$0xff] %v319
        %s321 = sand.u32 %s97, 1
        %s322 = scalar_lea.sflag [#allocation4], %s321
        %s323 = sand.u32 %s97, 1
        %s324 = smul.addr %s323, 8
        %s325 = scalar_lea.vmem [#allocation7], %s324
        // Predicated region
        $region41: #{tpu_custom_call.1} parent=31 // pred_check
          %p326 = pneg %p107
        $region42: #{tpu_custom_call.1} parent=31 // pred_check_branch
          %328 = sbr.rel (%p326) target = $region44
        $region43: #{tpu_custom_call.1} parent=31 // pred_region
          %s330 = ssub.s32 128, 128
          %331 = vsyncadd %s322, %s330
          %s332 = smul.addr %s21, 2
          %s333 = smul.addr %s332, 64
          %s334 = scalar_lea.hbm %s3, %s333
          %s336 = sshll.u32 %s325, 4
          %s337 = int_to_ptr.vmem [resolvable:$true] %s336
          %339 = dma.vmem_to_hbm [thread:$0]  %s337, 128, %s334, %s322
        $region44: #{tpu_custom_call.1} parent=31 // pred_fallthru
          _
      $region32: #{tpu_custom_call.1} parent=5 // pred_fallthru
        _
      %p340 = scmp.le.s32.totalorder 2, %s16
      // Predicated region
      $region45: #{tpu_custom_call.1} parent=5 // pred_check
        %p341 = pneg %p340
      $region46: #{tpu_custom_call.1} parent=5 // pred_check_branch
        %343 = sbr.rel (%p341) target = $region48
      $region47: #{tpu_custom_call.1} parent=5 // pred_region
        %s344 = ssub.s32 %s16, 2
        // Predicated region
        $region49: #{tpu_custom_call.1} parent=47 // pred_check
          %p345 = pneg %p113
        $region50: #{tpu_custom_call.1} parent=47 // pred_check_branch
          %347 = sbr.rel (%p345) target = $region52
        $region51: #{tpu_custom_call.1} parent=47 // pred_region
          %s348 = sand.u32 %s98, 1
          %s349 = scalar_lea.sflag [#allocation4], %s348
          %s350 = sand.u32 %s98, 1
          %s351 = smul.addr %s350, 8
          %s352 = scalar_lea.vmem [#allocation7], %s351
          %353 = dma.done %s349, 128
        $region52: #{tpu_custom_call.1} parent=47 // pred_fallthru
          _
      $region48: #{tpu_custom_call.1} parent=5 // pred_fallthru
        _
    $region6: #{tpu_custom_call.1} parent=1 // loop_footer
      %s20 = sadd.s32 1, %s16
    $region7: #{tpu_custom_call.1} parent=1 // loop_footer_branch
      %15 = sbr.rel target = $region3
    $region8: #{tpu_custom_call.1} parent=1 // loop_exit
      _
    %354 = vsyncpa [#allocation3], 1
    %s355 = scalar_lea.sflag [#allocation3], 1
    %356 = vsyncpa %s355, 1
    %357 = vsyncpa [#allocation6], 1
    %358 = vsyncpa [#allocation4], 1
    %s359 = scalar_lea.sflag [#allocation4], 1
    %360 = vsyncpa %s359, 1

</llo_original>
